<compile_context>
chip_gen: v6e
topology: v6e:2x2x1
jax: 0.10.0
libtpu: 0.0.40
codegen_flags: <defaults>
</compile_context>

<pallas_src>
import jax
import jax.numpy as jnp
from jax.experimental import pallas as pl
from jax.experimental.pallas import tpu as pltpu


# --------------------------------------------------------------------------- #
# Kernels
# --------------------------------------------------------------------------- #
def _skipgram_resident_kernel(x_ref, w_ref, out_ref):
    # x_ref : (TB, E) bf16   gathered embeddings (batch tile)
    # w_ref : (E, V)  bf16   full transposed Linear weight (VMEM-resident)
    # out   : (TB, V) f32    log-probs
    logits = jnp.dot(x_ref[...], w_ref[...],
                     preferred_element_type=jnp.float32)        # (TB, V)
    m = jnp.max(logits, axis=1, keepdims=True)                   # (TB, 1)
    shifted = logits - m
    lse = jnp.log(jnp.sum(jnp.exp(shifted), axis=1, keepdims=True))
    out_ref[...] = shifted - lse


def _skipgram_tiled_kernel(x_ref, w_ref, out_ref, m_ref, l_ref):
    # x_ref : (TB, E)  bf16   gathered embeddings (batch tile)
    # w_ref : (E, TV)  bf16   current vocab tile of the transposed weight
    # out   : (TB, V)  f32    resident output block (raw logits, then log-probs)
    # m/l   : (TB, 1)  f32    online-softmax running max / running sum-exp
    j = pl.program_id(1)
    tv = w_ref.shape[1]

    @pl.when(j == 0)
    def _():
        m_ref[...] = jnp.full_like(m_ref, -jnp.inf)
        l_ref[...] = jnp.zeros_like(l_ref)

    # MXU matmul: (TB, E) x (E, TV) -> (TB, TV), f32 accumulation.
    logits = jnp.dot(x_ref[...], w_ref[...],
                     preferred_element_type=jnp.float32)

    # Raw logits go straight into the resident output block (no separate cache).
    col = pl.multiple_of(j * tv, 128)
    out_ref[:, pl.ds(col, tv)] = logits

    # Online log-sum-exp across vocab tiles (VPU/EUP work).
    m_prev = m_ref[...]
    m_new = jnp.maximum(m_prev, jnp.max(logits, axis=1, keepdims=True))
    l_ref[...] = (l_ref[...] * jnp.exp(m_prev - m_new)
                  + jnp.sum(jnp.exp(logits - m_new), axis=1, keepdims=True))
    m_ref[...] = m_new

    # Last vocab tile: normalize the whole row block in place.
    @pl.when(j == pl.num_programs(1) - 1)
    def _():
        lse = m_ref[...] + jnp.log(l_ref[...])                   # (TB, 1)
        out_ref[...] = out_ref[...] - lse


# --------------------------------------------------------------------------- #
# Wrapper / tile selection
# --------------------------------------------------------------------------- #
def _round_up(x, m):
    return ((x + m - 1) // m) * m


def _largest_aligned_divisor(total, cap, align):
    """Largest t with total % t == 0, t % align == 0, t <= cap (total % align == 0)."""
    cap = max(align, min(cap, total))
    t = (cap // align) * align
    while t > align and total % t != 0:
        t -= align
    return t


def _vmem_limit_bytes():
    cap = None
    try:
        info = pltpu.get_tpu_info()
        cap = getattr(info, "vmem_capacity_bytes", None)
    except Exception:
        cap = None
    if not cap:
        cap = 64 * 1024 * 1024                 # conservative: v7x physical VMEM
    # Leave headroom for compiler-internal scratch; never exceed 100 MiB.
    return int(min(cap * 3 // 4, 100 * 1024 * 1024))


def skip_gram_forward(indices, emb_table, linear_weight, *, tb=None, tv=None,
                      compute_dtype=jnp.bfloat16):
    """Forward of SkipGramModel.

    indices       : (B,)  int     word ids
    emb_table     : (V,E) float   nn.Embedding(vocab, dim).weight
    linear_weight : (V,E) float   nn.Linear(dim, vocab, bias=False).weight
    returns       : (B,V) float32 log_softmax(embeds @ W.T, axis=1)
    """
    B = int(indices.shape[0])
    V, E = emb_table.shape
    assert linear_weight.shape == (V, E)
    # TODO(synk): support V not a multiple of 128 by padding the vocab axis and
    # masking the padded logits to -inf before the softmax.
    assert V % 128 == 0, "vocab_size must be a multiple of 128 for lane-dense tiles"

    itemsize = jnp.dtype(compute_dtype).itemsize
    vmem_limit = _vmem_limit_bytes()
    budget = vmem_limit - (2 << 20)

    # ---- batch tile: multiple of 8 (f32 sublane), capped so the resident
    # (tb, V) f32 output block (x2 output buffering) + embeds fit comfortably.
    if tb is None:
        tb = min(_round_up(B, 8), 256)
        while tb > 8 and (2 * tb * V * 4 + 2 * tb * E * itemsize) > budget // 2:
            tb = max(8, ((tb // 2) // 8) * 8)
    assert tb % 8 == 0, "tb must be a multiple of 8 (f32 sublane)"
    # TODO(synk): for huge vocabularies (tb*V*4 >> VMEM) switch to per-tile
    # (tb, tv) output blocks plus a second normalization sweep over the output.

    b_pad = _round_up(B, tb)
    num_b = b_pad // tb

    # ---- vocab tile: weight-resident fast path if the whole bf16 (E, V)
    # weight fits the remaining budget, else largest aligned divisor of V.
    remaining = budget - (2 * tb * V * 4 + 2 * tb * E * itemsize)
    if tv is None:
        if 2 * E * V * itemsize <= remaining:
            tv = V                              # weight stays resident in VMEM
        else:
            cap_elems = max(128, remaining // (2 * E * itemsize))
            tv = _largest_aligned_divisor(V, min(int(cap_elems), 8192), 128)
    assert V % tv == 0 and tv % 128 == 0
    num_v = V // tv

    # ---- host-side prep (once per call): gather + cast + transpose ----------
    # TODO(synk): in a real model, store the Linear weight as a bf16 (E, V)
    # parameter to avoid this per-call cast/transpose HBM pass.
    idx = jnp.clip(indices.astype(jnp.int32), 0, V - 1)
    if b_pad != B:
        idx = jnp.concatenate([idx, jnp.zeros((b_pad - B,), jnp.int32)])
    x = jnp.take(emb_table, idx, axis=0).astype(compute_dtype)    # (b_pad, E)
    w_t = linear_weight.T.astype(compute_dtype)                   # (E, V)

    params = pltpu.CompilerParams(
        dimension_semantics=(("parallel",) if num_v == 1
                             else ("parallel", "arbitrary")),
        vmem_limit_bytes=vmem_limit,
    )
    # TODO(synk): with num_b == 1 the parallel axis has extent 1, so the second
    # TensorCore on v7x idles; split the vocab sweep across cores in that case.

    if num_v == 1:
        out = pl.pallas_call(
            _skipgram_resident_kernel,
            out_shape=jax.ShapeDtypeStruct((b_pad, V), jnp.float32),
            grid_spec=pltpu.PrefetchScalarGridSpec(
                num_scalar_prefetch=0,
                grid=(num_b,),
                in_specs=[
                    pl.BlockSpec((tb, E), lambda i: (i, 0)),
                    pl.BlockSpec((E, V), lambda i: (0, 0)),      # resident weight
                ],
                out_specs=pl.BlockSpec((tb, V), lambda i: (i, 0)),
            ),
            compiler_params=params,
        )(x, w_t)
    else:
        out = pl.pallas_call(
            _skipgram_tiled_kernel,
            out_shape=jax.ShapeDtypeStruct((b_pad, V), jnp.float32),
            grid_spec=pltpu.PrefetchScalarGridSpec(
                num_scalar_prefetch=0,
                grid=(num_b, num_v),
                in_specs=[
                    pl.BlockSpec((tb, E), lambda i, j: (i, 0)),
                    pl.BlockSpec((E, tv), lambda i, j: (0, j)),
                ],
                out_specs=pl.BlockSpec((tb, V), lambda i, j: (i, 0)),
                scratch_shapes=[
                    pltpu.VMEM((tb, 1), jnp.float32),   # running max
                    pltpu.VMEM((tb, 1), jnp.float32),   # running sum-exp
                ],
            ),
            compiler_params=params,
        )(x, w_t)

    return out[:B] if b_pad != B else out


# --------------------------------------------------------------------------- #
# Demo / correctness check
# --------------------------------------------------------------------------- #
if __name__ == "__main__":
    VOCAB = 1024      # vocab_size
    EMB = 128         # embedding_dim
    BATCH = 8

    key = jax.random.PRNGKey(0)
    k_emb, k_lin, k_idx = jax.random.split(key, 3)

    # Parameter shapes matching the module:
    #   nn.Embedding(vocab, dim).weight          -> (VOCAB, EMB)
    #   nn.Linear(dim, vocab, bias=False).weight -> (VOCAB, EMB)
    emb_table = jax.random.normal(k_emb, (VOCAB, EMB), dtype=jnp.float32)
    linear_w = jax.random.normal(k_lin, (VOCAB, EMB), dtype=jnp.float32) * 0.05
    indices = jax.random.randint(k_idx, (BATCH,), 0, VOCAB, dtype=jnp.int32)

    # References: same matmul numerics (bf16 operands, f32 accum) and exact f32.
    embeds_ref = emb_table[indices]                                   # (B, E)
    logits_bf = jnp.dot(embeds_ref.astype(jnp.bfloat16),
                        linear_w.astype(jnp.bfloat16).T,
                        preferred_element_type=jnp.float32)
    ref_bf = jax.nn.log_softmax(logits_bf, axis=1)
    ref_f32 = jax.nn.log_softmax(embeds_ref @ linear_w.T, axis=1)

    # 1) Default path: whole bf16 weight fits VMEM -> weight-resident kernel.
    lp_fast = jax.block_until_ready(
        skip_gram_forward(indices, emb_table, linear_w))
    assert lp_fast.shape == (BATCH, VOCAB)
    assert jnp.allclose(lp_fast, ref_bf, atol=2e-3, rtol=2e-3), (
        float(jnp.max(jnp.abs(lp_fast - ref_bf))))
    assert jnp.allclose(lp_fast, ref_f32, atol=5e-2, rtol=5e-2)

    # 2) Forced vocab tiling (tv=256 -> 4 tiles): exercises the online-softmax
    #    kernel that large vocabularies would use.
    lp_tiled = jax.block_until_ready(
        skip_gram_forward(indices, emb_table, linear_w, tv=256))
    assert lp_tiled.shape == (BATCH, VOCAB)
    assert jnp.allclose(lp_tiled, ref_bf, atol=2e-3, rtol=2e-3), (
        float(jnp.max(jnp.abs(lp_tiled - ref_bf))))

    print("KERNEL_OK")
</pallas_src>

<mosaic_0001>
module attributes {stable_mosaic.version = 11 : i64} {
  func.func @_skipgram_resident_kernel(%arg0: i32, %arg1: memref<8x128xbf16, #tpu.memory_space<vmem>>, %arg2: memref<128x1024xbf16, #tpu.memory_space<vmem>>, %arg3: memref<8x1024xf32, #tpu.memory_space<vmem>>) attributes {dimension_semantics = [#tpu.dimension_semantics<parallel>], iteration_bounds = array<i64: 1>, scalar_prefetch = 0 : i64, scratch_operands = 0 : i64, tpu.core_type = #tpu.core_type<tc>, window_params = [{transform_indices = @transform_0, window_bounds = array<i64: 8, 128>}, {pipeline_mode = #tpu.pipeline_mode<synchronous>, transform_indices = @transform_1, window_bounds = array<i64: 128, 1024>}, {transform_indices = @transform_2, window_bounds = array<i64: 8, 1024>}]} {
    %c0 = arith.constant 0 : index
    %c0_0 = arith.constant 0 : index
    %0 = vector.load %arg1[%c0, %c0_0] : memref<8x128xbf16, #tpu.memory_space<vmem>>, vector<8x128xbf16>
    %c0_1 = arith.constant 0 : index
    %c0_2 = arith.constant 0 : index
    %1 = vector.load %arg2[%c0_1, %c0_2] : memref<128x1024xbf16, #tpu.memory_space<vmem>>, vector<128x1024xbf16>
    %cst = arith.constant dense<0.000000e+00> : vector<8x1024xf32>
    %2 = tpu.matmul %0, %1, %cst {dimension_numbers = #tpu.dot_dimension_numbers<[1], [0], [0], [1], [0, 0, 1, 1], [], []>} : vector<8x128xbf16>, vector<128x1024xbf16>, vector<8x1024xf32> -> vector<8x1024xf32>
    %cst_3 = arith.constant dense<0xFF800000> : vector<8xf32>
    %3 = vector.multi_reduction <maximumf>, %2, %cst_3 [1] : vector<8x1024xf32> to vector<8xf32>
    %4 = vector.shape_cast %3 : vector<8xf32> to vector<8x1xf32>
    %5 = vector.broadcast %4 : vector<8x1xf32> to vector<8x1024xf32>
    %6 = arith.subf %2, %5 : vector<8x1024xf32>
    %7 = math.exp %6 : vector<8x1024xf32>
    %cst_4 = arith.constant dense<0.000000e+00> : vector<8xf32>
    %8 = vector.multi_reduction <add>, %7, %cst_4 [1] : vector<8x1024xf32> to vector<8xf32>
    %9 = vector.shape_cast %8 : vector<8xf32> to vector<8x1xf32>
    %10 = math.log %9 : vector<8x1xf32>
    %11 = vector.broadcast %10 : vector<8x1xf32> to vector<8x1024xf32>
    %12 = arith.subf %6, %11 : vector<8x1024xf32>
    %c0_5 = arith.constant 0 : index
    %c0_6 = arith.constant 0 : index
    %13 = vector.load %arg3[%c0_5, %c0_6] : memref<8x1024xf32, #tpu.memory_space<vmem>>, vector<8x1024xf32>
    tpu.vector_store %arg3[%c0_5, %c0_6], %12 {strides = array<i32>} : memref<8x1024xf32, #tpu.memory_space<vmem>>, vector<8x1024xf32>,
    return
  }
  func.func @transform_0(%arg0: i32) -> (i32, i32) {
    %c0_i32 = arith.constant 0 : i32
    %c0_i32_0 = arith.constant 0 : i32
    return %arg0, %c0_i32 : i32, i32
  }
  func.func @transform_1(%arg0: i32) -> (i32, i32) {
    %c0_i32 = arith.constant 0 : i32
    %c0_i32_0 = arith.constant 0 : i32
    %c0_i32_1 = arith.constant 0 : i32
    return %c0_i32, %c0_i32_0 : i32, i32
  }
  func.func @transform_2(%arg0: i32) -> (i32, i32) {
    %c0_i32 = arith.constant 0 : i32
    %c0_i32_0 = arith.constant 0 : i32
    return %arg0, %c0_i32 : i32, i32
  }
}

</mosaic_0001>

<llo_original>
// kernel: tpu_custom_call.1
$region0: #{tpu_custom_call.1}
  #allocation0 [shape = 'u32[]', space=smem, size = 0x4, offset = 0x4, fixed_abs, tag = 'smem constant byte address 0x4 - core index']
  #allocation1 [shape = 'u32[144,128]{1,0:T(1,128)}', space=vmem, size = 0x12000, scoped, tag = 'internal scratch']
  %s0 = inlined_call_operand.hbm [shape: bf16[8,128], index: 0, kind: input, shape index: {}]
  %s1 = inlined_call_operand.hbm [shape: bf16[128,1024], index: 1, kind: input, shape index: {}]
  %s2 = inlined_call_operand.hbm [shape: f32[8,1024], index: 2, kind: output, shape index: {}]
  %s3 = sld [smem:[#allocation0]]
  $region26: #{tpu_custom_call.1} parent=0
    _
  %s5 = ssub.s32 1, %s3
  %s6 = scalar_select 0, %s5, %s3
  $region1: #{tpu_custom_call.1} parent=0
    #allocation2 [shape = 'u8[2048]{0}', space=vmem, size = 0x800, scoped, tag = 'input window, operand 0, single buffered']
    #allocation3 [shape = 's32[1]{0}', space=sflag, size = 0x4, scoped, tag = 'scoped memory for tpu_custom_call.1']
    #allocation4 [shape = 's32[1]{0}', space=sflag, size = 0x4, scoped, tag = 'scoped memory for tpu_custom_call.1']
    #allocation5 [shape = 'u8[262144]{0}', space=vmem, size = 0x40000, scoped, tag = 'input window, operand 1, single buffered']
    #allocation6 [shape = 's32[1]{0}', space=sflag, size = 0x4, scoped, tag = 'scoped memory for tpu_custom_call.1']
    #allocation7 [shape = 'u8[32768]{0}', space=vmem, size = 0x8000, scoped, tag = 'output window, operand 0, single buffered']
    %7 = vsyncpa [#allocation3], 0
    %8 = vsyncpa [#allocation6], 0
    %9 = vsyncpa [#allocation4], 0
    // Predicated region
    $region2: #{tpu_custom_call.1} parent=1 // pred_check
      _
    $region3: #{tpu_custom_call.1} parent=1 // pred_check_branch
      %11 = sbr.rel (0) target = $region5
    $region4: #{tpu_custom_call.1} parent=1 // pred_region
      %s13 = ssub.s32 64, 64
      %14 = vsyncadd [#allocation3], %s13
      %s16 = sshll.u32 [#allocation2], 4
      %s17 = int_to_ptr.vmem [resolvable:$true] %s16
      %19 = dma.hbm_to_vmem [thread:$0]  %s0, 64, %s17, [#allocation3]
    $region5: #{tpu_custom_call.1} parent=1 // pred_fallthru
      _
    // Predicated region
    $region6: #{tpu_custom_call.1} parent=1 // pred_check
      _
    $region7: #{tpu_custom_call.1} parent=1 // pred_check_branch
      %21 = sbr.rel (0) target = $region9
    $region8: #{tpu_custom_call.1} parent=1 // pred_region
      %s23 = ssub.s32 8192, 8192
      %24 = vsyncadd [#allocation6], %s23
      %s25 = sshll.u32 [#allocation5], 4
      %s26 = int_to_ptr.vmem [resolvable:$true] %s25
      %31 = dma.hbm_to_vmem [thread:$0]  %s1, 8192, %s26, [#allocation6], 512, 512, 32
    $region9: #{tpu_custom_call.1} parent=1 // pred_fallthru
      _
    // Predicated region
    $region10: #{tpu_custom_call.1} parent=1 // pred_check
      _
    $region11: #{tpu_custom_call.1} parent=1 // pred_check_branch
      %33 = sbr.rel (0) target = $region13
    $region12: #{tpu_custom_call.1} parent=1 // pred_region
      %34 = dma.done [#allocation3], 64
    $region13: #{tpu_custom_call.1} parent=1 // pred_fallthru
      _
    // Predicated region
    $region14: #{tpu_custom_call.1} parent=1 // pred_check
      _
    $region15: #{tpu_custom_call.1} parent=1 // pred_check_branch
      %36 = sbr.rel (0) target = $region17
    $region16: #{tpu_custom_call.1} parent=1 // pred_region
      %37 = dma.done [#allocation6], 8192
    $region17: #{tpu_custom_call.1} parent=1 // pred_fallthru
      _
    %v39 = vld [vmem:[#allocation2] sm:$0xf]
    %v40 = vld [vmem:[#allocation5] sm:$0xff]
    %v41 = vld [vmem:[#allocation5 + $0x8] sm:$0xff]
    %v42 = vld [vmem:[#allocation5 + $0x10] sm:$0xff]
    %v43 = vld [vmem:[#allocation5 + $0x18] sm:$0xff]
    %v44 = vld [vmem:[#allocation5 + $0x20] sm:$0xff]
    %v45 = vld [vmem:[#allocation5 + $0x28] sm:$0xff]
    %v46 = vld [vmem:[#allocation5 + $0x30] sm:$0xff]
    %v47 = vld [vmem:[#allocation5 + $0x38] sm:$0xff]
    %v48 = vld [vmem:[#allocation5 + $0x40] sm:$0xff]
    %v49 = vld [vmem:[#allocation5 + $0x48] sm:$0xff]
    %v50 = vld [vmem:[#allocation5 + $0x50] sm:$0xff]
    %v51 = vld [vmem:[#allocation5 + $0x58] sm:$0xff]
    %v52 = vld [vmem:[#allocation5 + $0x60] sm:$0xff]
    %v53 = vld [vmem:[#allocation5 + $0x68] sm:$0xff]
    %v54 = vld [vmem:[#allocation5 + $0x70] sm:$0xff]
    %v55 = vld [vmem:[#allocation5 + $0x78] sm:$0xff]
    %v56 = vld [vmem:[#allocation5 + $0x80] sm:$0xff]
    %v57 = vld [vmem:[#allocation5 + $0x88] sm:$0xff]
    %v58 = vld [vmem:[#allocation5 + $0x90] sm:$0xff]
    %v59 = vld [vmem:[#allocation5 + $0x98] sm:$0xff]
    %v60 = vld [vmem:[#allocation5 + $0xa0] sm:$0xff]
    %v61 = vld [vmem:[#allocation5 + $0xa8] sm:$0xff]
    %v62 = vld [vmem:[#allocation5 + $0xb0] sm:$0xff]
    %v63 = vld [vmem:[#allocation5 + $0xb8] sm:$0xff]
    %v64 = vld [vmem:[#allocation5 + $0xc0] sm:$0xff]
    %v65 = vld [vmem:[#allocation5 + $0xc8] sm:$0xff]
    %v66 = vld [vmem:[#allocation5 + $0xd0] sm:$0xff]
    %v67 = vld [vmem:[#allocation5 + $0xd8] sm:$0xff]
    %v68 = vld [vmem:[#allocation5 + $0xe0] sm:$0xff]
    %v69 = vld [vmem:[#allocation5 + $0xe8] sm:$0xff]
    %v70 = vld [vmem:[#allocation5 + $0xf0] sm:$0xff]
    %v71 = vld [vmem:[#allocation5 + $0xf8] sm:$0xff]
    %v72 = vld [vmem:[#allocation5 + $0x100] sm:$0xff]
    %v73 = vld [vmem:[#allocation5 + $0x108] sm:$0xff]
    %v74 = vld [vmem:[#allocation5 + $0x110] sm:$0xff]
    %v75 = vld [vmem:[#allocation5 + $0x118] sm:$0xff]
    %v76 = vld [vmem:[#allocation5 + $0x120] sm:$0xff]
    %v77 = vld [vmem:[#allocation5 + $0x128] sm:$0xff]
    %v78 = vld [vmem:[#allocation5 + $0x130] sm:$0xff]
    %v79 = vld [vmem:[#allocation5 + $0x138] sm:$0xff]
    %v80 = vld [vmem:[#allocation5 + $0x140] sm:$0xff]
    %v81 = vld [vmem:[#allocation5 + $0x148] sm:$0xff]
    %v82 = vld [vmem:[#allocation5 + $0x150] sm:$0xff]
    %v83 = vld [vmem:[#allocation5 + $0x158] sm:$0xff]
    %v84 = vld [vmem:[#allocation5 + $0x160] sm:$0xff]
    %v85 = vld [vmem:[#allocation5 + $0x168] sm:$0xff]
    %v86 = vld [vmem:[#allocation5 + $0x170] sm:$0xff]
    %v87 = vld [vmem:[#allocation5 + $0x178] sm:$0xff]
    %v88 = vld [vmem:[#allocation5 + $0x180] sm:$0xff]
    %v89 = vld [vmem:[#allocation5 + $0x188] sm:$0xff]
    %v90 = vld [vmem:[#allocation5 + $0x190] sm:$0xff]
    %v91 = vld [vmem:[#allocation5 + $0x198] sm:$0xff]
    %v92 = vld [vmem:[#allocation5 + $0x1a0] sm:$0xff]
    %v93 = vld [vmem:[#allocation5 + $0x1a8] sm:$0xff]
    %v94 = vld [vmem:[#allocation5 + $0x1b0] sm:$0xff]
    %v95 = vld [vmem:[#allocation5 + $0x1b8] sm:$0xff]
    %v96 = vld [vmem:[#allocation5 + $0x1c0] sm:$0xff]
    %v97 = vld [vmem:[#allocation5 + $0x1c8] sm:$0xff]
    %v98 = vld [vmem:[#allocation5 + $0x1d0] sm:$0xff]
    %v99 = vld [vmem:[#allocation5 + $0x1d8] sm:$0xff]
    %v100 = vld [vmem:[#allocation5 + $0x1e0] sm:$0xff]
    %v101 = vld [vmem:[#allocation5 + $0x1e8] sm:$0xff]
    %v102 = vld [vmem:[#allocation5 + $0x1f0] sm:$0xff]
    %v103 = vld [vmem:[#allocation5 + $0x1f8] sm:$0xff]
    %v168 = vunpack.c.l.b16 %v40
    %v169 = vunpack.c.h.b16 %v40
    %v170 = vunpack.c.l.b16 %v41
    %v171 = vunpack.c.h.b16 %v41
    %v172 = vunpack.c.l.b16 %v42
    %v173 = vunpack.c.h.b16 %v42
    %v174 = vunpack.c.l.b16 %v43
    %v175 = vunpack.c.h.b16 %v43
    %v176 = vunpack.c.l.b16 %v44
    %v177 = vunpack.c.h.b16 %v44
    %v178 = vunpack.c.l.b16 %v45
    %v179 = vunpack.c.h.b16 %v45
    %v180 = vunpack.c.l.b16 %v46
    %v181 = vunpack.c.h.b16 %v46
    %v182 = vunpack.c.l.b16 %v47
    %v183 = vunpack.c.h.b16 %v47
    %v184 = vunpack.c.l.b16 %v48
    %v185 = vunpack.c.h.b16 %v48
    %v186 = vunpack.c.l.b16 %v49
    %v187 = vunpack.c.h.b16 %v49
    %v188 = vunpack.c.l.b16 %v50
    %v189 = vunpack.c.h.b16 %v50
    %v190 = vunpack.c.l.b16 %v51
    %v191 = vunpack.c.h.b16 %v51
    %v192 = vunpack.c.l.b16 %v52
    %v193 = vunpack.c.h.b16 %v52
    %v194 = vunpack.c.l.b16 %v53
    %v195 = vunpack.c.h.b16 %v53
    %v196 = vunpack.c.l.b16 %v54
    %v197 = vunpack.c.h.b16 %v54
    %v198 = vunpack.c.l.b16 %v55
    %v199 = vunpack.c.h.b16 %v55
    %v200 = vunpack.c.l.b16 %v56
    %v201 = vunpack.c.h.b16 %v56
    %v202 = vunpack.c.l.b16 %v57
    %v203 = vunpack.c.h.b16 %v57
    %v204 = vunpack.c.l.b16 %v58
    %v205 = vunpack.c.h.b16 %v58
    %v206 = vunpack.c.l.b16 %v59
    %v207 = vunpack.c.h.b16 %v59
    %v208 = vunpack.c.l.b16 %v60
    %v209 = vunpack.c.h.b16 %v60
    %v210 = vunpack.c.l.b16 %v61
    %v211 = vunpack.c.h.b16 %v61
    %v212 = vunpack.c.l.b16 %v62
    %v213 = vunpack.c.h.b16 %v62
    %v214 = vunpack.c.l.b16 %v63
    %v215 = vunpack.c.h.b16 %v63
    %v216 = vunpack.c.l.b16 %v64
    %v217 = vunpack.c.h.b16 %v64
    %v218 = vunpack.c.l.b16 %v65
    %v219 = vunpack.c.h.b16 %v65
    %v220 = vunpack.c.l.b16 %v66
    %v221 = vunpack.c.h.b16 %v66
    %v222 = vunpack.c.l.b16 %v67
    %v223 = vunpack.c.h.b16 %v67
    %v224 = vunpack.c.l.b16 %v68
    %v225 = vunpack.c.h.b16 %v68
    %v226 = vunpack.c.l.b16 %v69
    %v227 = vunpack.c.h.b16 %v69
    %v228 = vunpack.c.l.b16 %v70
    %v229 = vunpack.c.h.b16 %v70
    %v230 = vunpack.c.l.b16 %v71
    %v231 = vunpack.c.h.b16 %v71
    %v232 = vunpack.c.l.b16 %v72
    %v233 = vunpack.c.h.b16 %v72
    %v234 = vunpack.c.l.b16 %v73
    %v235 = vunpack.c.h.b16 %v73
    %v236 = vunpack.c.l.b16 %v74
    %v237 = vunpack.c.h.b16 %v74
    %v238 = vunpack.c.l.b16 %v75
    %v239 = vunpack.c.h.b16 %v75
    %v240 = vunpack.c.l.b16 %v76
    %v241 = vunpack.c.h.b16 %v76
    %v242 = vunpack.c.l.b16 %v77
    %v243 = vunpack.c.h.b16 %v77
    %v244 = vunpack.c.l.b16 %v78
    %v245 = vunpack.c.h.b16 %v78
    %v246 = vunpack.c.l.b16 %v79
    %v247 = vunpack.c.h.b16 %v79
    %v248 = vunpack.c.l.b16 %v80
    %v249 = vunpack.c.h.b16 %v80
    %v250 = vunpack.c.l.b16 %v81
    %v251 = vunpack.c.h.b16 %v81
    %v252 = vunpack.c.l.b16 %v82
    %v253 = vunpack.c.h.b16 %v82
    %v254 = vunpack.c.l.b16 %v83
    %v255 = vunpack.c.h.b16 %v83
    %v256 = vunpack.c.l.b16 %v84
    %v257 = vunpack.c.h.b16 %v84
    %v258 = vunpack.c.l.b16 %v85
    %v259 = vunpack.c.h.b16 %v85
    %v260 = vunpack.c.l.b16 %v86
    %v261 = vunpack.c.h.b16 %v86
    %v262 = vunpack.c.l.b16 %v87
    %v263 = vunpack.c.h.b16 %v87
    %v264 = vunpack.c.l.b16 %v88
    %v265 = vunpack.c.h.b16 %v88
    %v266 = vunpack.c.l.b16 %v89
    %v267 = vunpack.c.h.b16 %v89
    %v268 = vunpack.c.l.b16 %v90
    %v269 = vunpack.c.h.b16 %v90
    %v270 = vunpack.c.l.b16 %v91
    %v271 = vunpack.c.h.b16 %v91
    %v272 = vunpack.c.l.b16 %v92
    %v273 = vunpack.c.h.b16 %v92
    %v274 = vunpack.c.l.b16 %v93
    %v275 = vunpack.c.h.b16 %v93
    %v276 = vunpack.c.l.b16 %v94
    %v277 = vunpack.c.h.b16 %v94
    %v278 = vunpack.c.l.b16 %v95
    %v279 = vunpack.c.h.b16 %v95
    %v280 = vunpack.c.l.b16 %v96
    %v281 = vunpack.c.h.b16 %v96
    %v282 = vunpack.c.l.b16 %v97
    %v283 = vunpack.c.h.b16 %v97
    %v284 = vunpack.c.l.b16 %v98
    %v285 = vunpack.c.h.b16 %v98
    %v286 = vunpack.c.l.b16 %v99
    %v287 = vunpack.c.h.b16 %v99
    %v288 = vunpack.c.l.b16 %v100
    %v289 = vunpack.c.h.b16 %v100
    %v290 = vunpack.c.l.b16 %v101
    %v291 = vunpack.c.h.b16 %v101
    %v292 = vunpack.c.l.b16 %v102
    %v293 = vunpack.c.h.b16 %v102
    %v294 = vunpack.c.l.b16 %v103
    %v295 = vunpack.c.h.b16 %v103
    %v296 = vpack.c.b16 %v176, %v168
    %v297 = vpack.c.b16 %v177, %v169
    %v298 = vpack.c.b16 %v178, %v170
    %v299 = vpack.c.b16 %v179, %v171
    %v300 = vpack.c.b16 %v180, %v172
    %v301 = vpack.c.b16 %v181, %v173
    %v302 = vpack.c.b16 %v182, %v174
    %v303 = vpack.c.b16 %v183, %v175
    %v304 = vpack.c.b16 %v192, %v184
    %v305 = vpack.c.b16 %v193, %v185
    %v306 = vpack.c.b16 %v194, %v186
    %v307 = vpack.c.b16 %v195, %v187
    %v308 = vpack.c.b16 %v196, %v188
    %v309 = vpack.c.b16 %v197, %v189
    %v310 = vpack.c.b16 %v198, %v190
    %v311 = vpack.c.b16 %v199, %v191
    %v312 = vpack.c.b16 %v208, %v200
    %v313 = vpack.c.b16 %v209, %v201
    %v314 = vpack.c.b16 %v210, %v202
    %v315 = vpack.c.b16 %v211, %v203
    %v316 = vpack.c.b16 %v212, %v204
    %v317 = vpack.c.b16 %v213, %v205
    %v318 = vpack.c.b16 %v214, %v206
    %v319 = vpack.c.b16 %v215, %v207
    %v320 = vpack.c.b16 %v224, %v216
    %v321 = vpack.c.b16 %v225, %v217
    %v322 = vpack.c.b16 %v226, %v218
    %v323 = vpack.c.b16 %v227, %v219
    %v324 = vpack.c.b16 %v228, %v220
    %v325 = vpack.c.b16 %v229, %v221
    %v326 = vpack.c.b16 %v230, %v222
    %v327 = vpack.c.b16 %v231, %v223
    %v328 = vpack.c.b16 %v240, %v232
    %v329 = vpack.c.b16 %v241, %v233
    %v330 = vpack.c.b16 %v242, %v234
    %v331 = vpack.c.b16 %v243, %v235
    %v332 = vpack.c.b16 %v244, %v236
    %v333 = vpack.c.b16 %v245, %v237
    %v334 = vpack.c.b16 %v246, %v238
    %v335 = vpack.c.b16 %v247, %v239
    %v336 = vpack.c.b16 %v256, %v248
    %v337 = vpack.c.b16 %v257, %v249
    %v338 = vpack.c.b16 %v258, %v250
    %v339 = vpack.c.b16 %v259, %v251
    %v340 = vpack.c.b16 %v260, %v252
    %v341 = vpack.c.b16 %v261, %v253
    %v342 = vpack.c.b16 %v262, %v254
    %v343 = vpack.c.b16 %v263, %v255
    %v344 = vpack.c.b16 %v272, %v264
    %v345 = vpack.c.b16 %v273, %v265
    %v346 = vpack.c.b16 %v274, %v266
    %v347 = vpack.c.b16 %v275, %v267
    %v348 = vpack.c.b16 %v276, %v268
    %v349 = vpack.c.b16 %v277, %v269
    %v350 = vpack.c.b16 %v278, %v270
    %v351 = vpack.c.b16 %v279, %v271
    %v352 = vpack.c.b16 %v288, %v280
    %v353 = vpack.c.b16 %v289, %v281
    %v354 = vpack.c.b16 %v290, %v282
    %v355 = vpack.c.b16 %v291, %v283
    %v356 = vpack.c.b16 %v292, %v284
    %v357 = vpack.c.b16 %v293, %v285
    %v358 = vpack.c.b16 %v294, %v286
    %v359 = vpack.c.b16 %v295, %v287
    %424 = vmatprep.subr.bf16.mxu0 %v353
    %425 = vmatpush1.bf16.msra.mxu0 %v352
    %426 = vmatprep.subr.bf16.mxu0 %v345
    %427 = vmatpush1.bf16.msra.mxu0 %v344
    %428 = vmatprep.subr.bf16.mxu0 %v337
    %429 = vmatpush1.bf16.msra.mxu0 %v336
    %430 = vmatprep.subr.bf16.mxu0 %v329
    %431 = vmatpush1.bf16.msra.mxu0 %v328
    %432 = vmatprep.subr.bf16.mxu0 %v321
    %433 = vmatpush1.bf16.msra.mxu0 %v320
    %434 = vmatprep.subr.bf16.mxu0 %v313
    %435 = vmatpush1.bf16.msra.mxu0 %v312
    %436 = vmatprep.subr.bf16.mxu0 %v305
    %437 = vmatpush1.bf16.msra.mxu0 %v304
    %438 = vmatprep.subr.bf16.mxu0 %v297
    %439 = vmatpush1.bf16.msra.mxu0 %v296
    %440 = vmatprep.subr.bf16.mxu0 0
    %441 = vmatpush2.bf16.msra.mxu0 0
    %442 = vmatprep.subr.bf16.mxu0 0
    %443 = vmatpush2.bf16.msra.mxu0 0
    %444 = vmatprep.subr.bf16.mxu0 0
    %445 = vmatpush2.bf16.msra.mxu0 0
    %446 = vmatprep.subr.bf16.mxu0 0
    %447 = vmatpush2.bf16.msra.mxu0 0
    %448 = vmatprep.subr.bf16.mxu0 0
    %449 = vmatpush2.bf16.msra.mxu0 0
    %450 = vmatprep.subr.bf16.mxu0 0
    %451 = vmatpush2.bf16.msra.mxu0 0
    %452 = vmatprep.subr.bf16.mxu0 0
    %453 = vmatpush2.bf16.msra.mxu0 0
    %454 = vmatprep.subr.bf16.mxu0 0
    %455 = vmatpush2.bf16.msra.mxu0 0
    %456 = vmatprep.mubr.bf16.mxu0 0
    %457 = vmatmul.mubr.bf16.gmra.mxu0 %v39
    %v458 = vpop.f32.mrf.mxu0
    %v459 = vadd.f32 0.0, %v458
    %v460 = vpop.f32.mrf.mxu0
    %v461 = vadd.f32 0.0, %v460
    %v462 = vpop.f32.mrf.mxu0
    %v463 = vpop.f32.mrf.mxu0
    %464 = vdwg.mxu0
    %465 = vmatprep.subr.bf16.mxu0 %v355
    %466 = vmatpush1.bf16.msra.mxu0 %v354
    %467 = vmatprep.subr.bf16.mxu0 %v347
    %468 = vmatpush1.bf16.msra.mxu0 %v346
    %469 = vmatprep.subr.bf16.mxu0 %v339
    %470 = vmatpush1.bf16.msra.mxu0 %v338
    %471 = vmatprep.subr.bf16.mxu0 %v331
    %472 = vmatpush1.bf16.msra.mxu0 %v330
    %473 = vmatprep.subr.bf16.mxu0 %v323
    %474 = vmatpush1.bf16.msra.mxu0 %v322
    %475 = vmatprep.subr.bf16.mxu0 %v315
    %476 = vmatpush1.bf16.msra.mxu0 %v314
    %477 = vmatprep.subr.bf16.mxu0 %v307
    %478 = vmatpush1.bf16.msra.mxu0 %v306
    %479 = vmatprep.subr.bf16.mxu0 %v299
    %480 = vmatpush1.bf16.msra.mxu0 %v298
    %481 = vmatprep.subr.bf16.mxu0 0
    %482 = vmatpush2.bf16.msra.mxu0 0
    %483 = vmatprep.subr.bf16.mxu0 0
    %484 = vmatpush2.bf16.msra.mxu0 0
    %485 = vmatprep.subr.bf16.mxu0 0
    %486 = vmatpush2.bf16.msra.mxu0 0
    %487 = vmatprep.subr.bf16.mxu0 0
    %488 = vmatpush2.bf16.msra.mxu0 0
    %489 = vmatprep.subr.bf16.mxu0 0
    %490 = vmatpush2.bf16.msra.mxu0 0
    %491 = vmatprep.subr.bf16.mxu0 0
    %492 = vmatpush2.bf16.msra.mxu0 0
    %493 = vmatprep.subr.bf16.mxu0 0
    %494 = vmatpush2.bf16.msra.mxu0 0
    %495 = vmatprep.subr.bf16.mxu0 0
    %496 = vmatpush2.bf16.msra.mxu0 0
    %497 = vmatprep.mubr.bf16.mxu0 0
    %498 = vmatmul.mubr.bf16.gmra.mxu0 %v39
    %v499 = vpop.f32.mrf.mxu0
    %v500 = vadd.f32 0.0, %v499
    %v501 = vpop.f32.mrf.mxu0
    %v502 = vadd.f32 0.0, %v501
    %v503 = vpop.f32.mrf.mxu0
    %v504 = vpop.f32.mrf.mxu0
    %505 = vdwg.mxu0
    %506 = vmatprep.subr.bf16.mxu0 %v357
    %507 = vmatpush1.bf16.msra.mxu0 %v356
    %508 = vmatprep.subr.bf16.mxu0 %v349
    %509 = vmatpush1.bf16.msra.mxu0 %v348
    %510 = vmatprep.subr.bf16.mxu0 %v341
    %511 = vmatpush1.bf16.msra.mxu0 %v340
    %512 = vmatprep.subr.bf16.mxu0 %v333
    %513 = vmatpush1.bf16.msra.mxu0 %v332
    %514 = vmatprep.subr.bf16.mxu0 %v325
    %515 = vmatpush1.bf16.msra.mxu0 %v324
    %516 = vmatprep.subr.bf16.mxu0 %v317
    %517 = vmatpush1.bf16.msra.mxu0 %v316
    %518 = vmatprep.subr.bf16.mxu0 %v309
    %519 = vmatpush1.bf16.msra.mxu0 %v308
    %520 = vmatprep.subr.bf16.mxu0 %v301
    %521 = vmatpush1.bf16.msra.mxu0 %v300
    %522 = vmatprep.subr.bf16.mxu0 0
    %523 = vmatpush2.bf16.msra.mxu0 0
    %524 = vmatprep.subr.bf16.mxu0 0
    %525 = vmatpush2.bf16.msra.mxu0 0
    %526 = vmatprep.subr.bf16.mxu0 0
    %527 = vmatpush2.bf16.msra.mxu0 0
    %528 = vmatprep.subr.bf16.mxu0 0
    %529 = vmatpush2.bf16.msra.mxu0 0
    %530 = vmatprep.subr.bf16.mxu0 0
    %531 = vmatpush2.bf16.msra.mxu0 0
    %532 = vmatprep.subr.bf16.mxu0 0
    %533 = vmatpush2.bf16.msra.mxu0 0
    %534 = vmatprep.subr.bf16.mxu0 0
    %535 = vmatpush2.bf16.msra.mxu0 0
    %536 = vmatprep.subr.bf16.mxu0 0
    %537 = vmatpush2.bf16.msra.mxu0 0
    %538 = vmatprep.mubr.bf16.mxu0 0
    %539 = vmatmul.mubr.bf16.gmra.mxu0 %v39
    %v540 = vpop.f32.mrf.mxu0
    %v541 = vadd.f32 0.0, %v540
    %v542 = vpop.f32.mrf.mxu0
    %v543 = vadd.f32 0.0, %v542
    %v544 = vpop.f32.mrf.mxu0
    %v545 = vpop.f32.mrf.mxu0
    %546 = vdwg.mxu0
    %547 = vmatprep.subr.bf16.mxu0 %v359
    %548 = vmatpush1.bf16.msra.mxu0 %v358
    %549 = vmatprep.subr.bf16.mxu0 %v351
    %550 = vmatpush1.bf16.msra.mxu0 %v350
    %551 = vmatprep.subr.bf16.mxu0 %v343
    %552 = vmatpush1.bf16.msra.mxu0 %v342
    %553 = vmatprep.subr.bf16.mxu0 %v335
    %554 = vmatpush1.bf16.msra.mxu0 %v334
    %555 = vmatprep.subr.bf16.mxu0 %v327
    %556 = vmatpush1.bf16.msra.mxu0 %v326
    %557 = vmatprep.subr.bf16.mxu0 %v319
    %558 = vmatpush1.bf16.msra.mxu0 %v318
    %559 = vmatprep.subr.bf16.mxu0 %v311
    %560 = vmatpush1.bf16.msra.mxu0 %v310
    %561 = vmatprep.subr.bf16.mxu0 %v303
    %562 = vmatpush1.bf16.msra.mxu0 %v302
    %563 = vmatprep.subr.bf16.mxu0 0
    %564 = vmatpush2.bf16.msra.mxu0 0
    %565 = vmatprep.subr.bf16.mxu0 0
    %566 = vmatpush2.bf16.msra.mxu0 0
    %567 = vmatprep.subr.bf16.mxu0 0
    %568 = vmatpush2.bf16.msra.mxu0 0
    %569 = vmatprep.subr.bf16.mxu0 0
    %570 = vmatpush2.bf16.msra.mxu0 0
    %571 = vmatprep.subr.bf16.mxu0 0
    %572 = vmatpush2.bf16.msra.mxu0 0
    %573 = vmatprep.subr.bf16.mxu0 0
    %574 = vmatpush2.bf16.msra.mxu0 0
    %575 = vmatprep.subr.bf16.mxu0 0
    %576 = vmatpush2.bf16.msra.mxu0 0
    %577 = vmatprep.subr.bf16.mxu0 0
    %578 = vmatpush2.bf16.msra.mxu0 0
    %579 = vmatprep.mubr.bf16.mxu0 0
    %580 = vmatmul.mubr.bf16.gmra.mxu0 %v39
    %v581 = vpop.f32.mrf.mxu0
    %v582 = vadd.f32 0.0, %v581
    %v583 = vpop.f32.mrf.mxu0
    %v584 = vadd.f32 0.0, %v583
    %v585 = vpop.f32.mrf.mxu0
    %v586 = vpop.f32.mrf.mxu0
    %587 = vdwg.mxu0
    %v588 = vmax.f32 %v459, %v541
    %v589 = vmax.f32 %v461, %v543
    %v590 = vmax.f32 %v500, %v582
    %v591 = vmax.f32 %v502, %v584
    %v592 = vmax.f32 %v588, %v589
    %v593 = vmax.f32 %v590, %v591
    %v594 = vmax.f32 %v592, %v593
    %595 = vmax.xlane.f32.xlu0 %v594
    %v596 = vpop.xlane.xlu0 %595
    %v597 = vsub.f32 %v459, %v596
    %v598 = vsub.f32 %v461, %v596
    %v599 = vsub.f32 %v500, %v596
    %v600 = vsub.f32 %v502, %v596
    %v601 = vsub.f32 %v541, %v596
    %v602 = vsub.f32 %v543, %v596
    %v603 = vsub.f32 %v582, %v596
    %v604 = vsub.f32 %v584, %v596
    %v605 = vmul.f32 %v597, 1.442695
    %v606 = vpow.pop %v605
    %v607 = vmul.f32 %v598, 1.442695
    %v608 = vpow.pop %v607
    %v609 = vmul.f32 %v599, 1.442695
    %v610 = vpow.pop %v609
    %v611 = vmul.f32 %v600, 1.442695
    %v612 = vpow.pop %v611
    %v613 = vmul.f32 %v601, 1.442695
    %v614 = vpow.pop %v613
    %v615 = vmul.f32 %v602, 1.442695
    %v616 = vpow.pop %v615
    %v617 = vmul.f32 %v603, 1.442695
    %v618 = vpow.pop %v617
    %v619 = vmul.f32 %v604, 1.442695
    %v620 = vpow.pop %v619
    %v621 = vadd.f32 %v606, %v608
    %v622 = vadd.f32 %v621, %v610
    %v623 = vadd.f32 %v622, %v612
    %v624 = vadd.f32 %v623, %v614
    %v625 = vadd.f32 %v624, %v616
    %v626 = vadd.f32 %v625, %v618
    %v627 = vadd.f32 %v626, %v620
    %628 = vadd.xlane.f32.xlu0 %v627
    %v629 = vpop.xlane.xlu0 %628
    %v630 = vlog2.pop %v629
    %v631 = vmul.f32 %v630, 0.6931472
    %v632 = vsub.f32 %v597, %v631
    %v633 = vsub.f32 %v598, %v631
    %v634 = vsub.f32 %v599, %v631
    %v635 = vsub.f32 %v600, %v631
    %v636 = vsub.f32 %v601, %v631
    %v637 = vsub.f32 %v602, %v631
    %v638 = vsub.f32 %v603, %v631
    %v639 = vsub.f32 %v604, %v631
    %640 = vst [vmem:[#allocation7] sm:$0xff] %v632
    %641 = vst [vmem:[#allocation7 + $0x8] sm:$0xff] %v633
    %642 = vst [vmem:[#allocation7 + $0x10] sm:$0xff] %v634
    %643 = vst [vmem:[#allocation7 + $0x18] sm:$0xff] %v635
    %644 = vst [vmem:[#allocation7 + $0x20] sm:$0xff] %v636
    %645 = vst [vmem:[#allocation7 + $0x28] sm:$0xff] %v637
    %646 = vst [vmem:[#allocation7 + $0x30] sm:$0xff] %v638
    %647 = vst [vmem:[#allocation7 + $0x38] sm:$0xff] %v639
    // Predicated region
    $region18: #{tpu_custom_call.1} parent=1 // pred_check
      _
    $region19: #{tpu_custom_call.1} parent=1 // pred_check_branch
      %649 = sbr.rel (0) target = $region21
    $region20: #{tpu_custom_call.1} parent=1 // pred_region
      %s651 = ssub.s32 1024, 1024
      %652 = vsyncadd [#allocation4], %s651
      %s654 = sshll.u32 [#allocation7], 4
      %s655 = int_to_ptr.vmem [resolvable:$true] %s654
      %657 = dma.vmem_to_hbm [thread:$0]  %s655, 1024, %s2, [#allocation4]
    $region21: #{tpu_custom_call.1} parent=1 // pred_fallthru
      _
    // Predicated region
    $region22: #{tpu_custom_call.1} parent=1 // pred_check
      _
    $region23: #{tpu_custom_call.1} parent=1 // pred_check_branch
      %659 = sbr.rel (0) target = $region25
    $region24: #{tpu_custom_call.1} parent=1 // pred_region
      %660 = dma.done [#allocation4], 1024
    $region25: #{tpu_custom_call.1} parent=1 // pred_fallthru
      _
    %661 = vsyncpa [#allocation3], 1
    %662 = vsyncpa [#allocation6], 1
    %663 = vsyncpa [#allocation4], 1

</llo_original>
